<compile_context>
chip_gen: v7x
topology: tpu7x:2x2x1
jax: 0.10.0
libtpu: 0.0.40
codegen_flags: <defaults>
</compile_context>

<pallas_src>
import functools

import jax
import jax.numpy as jnp
from jax import lax
from jax.experimental import pallas as pl
from jax.experimental.pallas import tpu as pltpu


# ----------------------------- Pallas kernel --------------------------------

def _l2norm(h):
    """Row-wise L2 normalize, matching F.normalize(p=2, dim=-1, eps=1e-12)."""
    sumsq = jnp.sum(h * h, axis=-1, keepdims=True)
    # x / max(||x||, 1e-12)  ==  x * rsqrt(max(||x||^2, 1e-24))
    return h * lax.rsqrt(jnp.maximum(sumsq, 1e-24))


def _fused_gnn_kernel(num_snapshots, dim_inner,
                      x_ref, a_full_ref, a_snap_ref,
                      w_pre_ref, b_pre_ref,
                      w_mp0_ref, b_mp0_ref,
                      w_mp1_ref, b_mp1_sum_ref,
                      w_head_ref, b_head_ref,
                      o_ref):
    """Entire GNN forward (encoder=identity, pre_mp, 2 mp layers, head)."""
    f32 = jnp.float32

    # encoder: identity.
    x = x_ref[...]

    # pre_mp: Linear(dim_in, dim_inner) + ReLU.
    h = jnp.dot(x, w_pre_ref[...], preferred_element_type=f32) + b_pre_ref[...]
    h = jnp.maximum(h, 0.0)

    # mp layer 0 (num_snapshots=1, full edge_index):
    #   h = ReLU(A_full @ (h @ W0) + b0), then per-layer L2 norm.
    xw0 = jnp.dot(h, w_mp0_ref[...], preferred_element_type=f32)
    h = jnp.dot(a_full_ref[...], xw0, preferred_element_type=f32) + b_mp0_ref[...]
    h = _l2norm(jnp.maximum(h, 0.0))

    # mp layer 1 (last): one GCN per snapshot, SUM aggregation.
    # Batched weight matmul: w_mp1_ref is (dim_inner, S*dim_inner) so every
    # snapshot's X@W_s comes out of a single lane-dense MXU matmul.
    # TODO(synk): torch forward skips snapshots whose edge_index is empty
    # (data-dependent control flow); here all snapshots are assumed non-empty.
    xw_all = jnp.dot(h, w_mp1_ref[...], preferred_element_type=f32)  # (N, S*D)
    acc = jnp.dot(a_snap_ref[0],
                  xw_all[:, 0:dim_inner],
                  preferred_element_type=f32)
    for s in range(1, num_snapshots):
        acc = acc + jnp.dot(a_snap_ref[s],
                            xw_all[:, s * dim_inner:(s + 1) * dim_inner],
                            preferred_element_type=f32)
    # sum aggregation adds every snapshot bias once (precomputed in wrapper).
    acc = acc + b_mp1_sum_ref[...]
    h = _l2norm(jnp.maximum(acc, 0.0))

    # stage-end F.normalize: idempotent after the per-layer L2 norm -> skipped.

    # post_mp node head: Linear(dim_inner, dim_out).
    out = jnp.dot(h, w_head_ref[...], preferred_element_type=f32) + b_head_ref[...]
    o_ref[...] = out.astype(o_ref.dtype)


def gnn_forward(x, adj_full, adj_snapshots, params):
    """Single fused pallas_call implementing the full GNN forward."""
    N, dim_in = x.shape
    S = adj_snapshots.shape[0]
    dim_inner = params["w_pre"].shape[1]
    dim_out = params["w_head"].shape[1]

    # Flatten per-snapshot weights to a lane-dense (dim_inner, S*dim_inner)
    # matrix (one MXU matmul instead of S narrow ones).
    w_mp1_flat = jnp.transpose(params["w_mp1"], (1, 0, 2)).reshape(
        dim_inner, S * dim_inner)

    b_pre = params["b_pre"].reshape(1, dim_inner)
    b_mp0 = params["b_mp0"].reshape(1, dim_inner)
    # Sum-aggregation adds every snapshot bias exactly once; fold the sum here.
    b_mp1_sum = jnp.sum(params["b_mp1"], axis=0).reshape(1, dim_inner)
    b_head = params["b_head"].reshape(1, dim_out)

    full2d = lambda r, c: pl.BlockSpec((r, c), lambda i: (0, 0))

    return pl.pallas_call(
        functools.partial(_fused_gnn_kernel, S, dim_inner),
        out_shape=jax.ShapeDtypeStruct((N, dim_out), x.dtype),
        grid=(1,),
        in_specs=[
            full2d(N, dim_in),                                   # x
            full2d(N, N),                                        # adj_full
            pl.BlockSpec((S, N, N), lambda i: (0, 0, 0)),        # adj_snapshots
            full2d(dim_in, dim_inner),                           # w_pre
            full2d(1, dim_inner),                                # b_pre
            full2d(dim_inner, dim_inner),                        # w_mp0
            full2d(1, dim_inner),                                # b_mp0
            full2d(dim_inner, S * dim_inner),                    # w_mp1 (flat)
            full2d(1, dim_inner),                                # b_mp1 (summed)
            full2d(dim_inner, dim_out),                          # w_head
            full2d(1, dim_out),                                  # b_head
        ],
        out_specs=full2d(N, dim_out),
        compiler_params=pltpu.CompilerParams(
            dimension_semantics=("arbitrary",)),
    )(x, adj_full, adj_snapshots,
      params["w_pre"], b_pre,
      params["w_mp0"], b_mp0,
      w_mp1_flat, b_mp1_sum,
      params["w_head"], b_head)


# ------------------------------- JAX glue -----------------------------------

def gcn_norm_adj(edge_index, num_nodes):
    """Dense GCN-normalized adjacency: D^{-1/2} (A + I) D^{-1/2}."""
    src, dst = edge_index[0], edge_index[1]
    a = jnp.zeros((num_nodes, num_nodes), jnp.float32).at[dst, src].set(1.0)
    a = a + jnp.eye(num_nodes, dtype=jnp.float32)
    deg = a.sum(axis=1)
    dinv = jnp.where(deg > 0, 1.0 / jnp.sqrt(deg), 0.0)
    return dinv[:, None] * a * dinv[None, :]


def init_params(key, dim_in, dim_inner, dim_out, num_snapshots):
    ks = jax.random.split(key, 6)
    scale = 0.1
    return {
        # pre_mp: Linear + ReLU
        "w_pre": scale * jax.random.normal(ks[0], (dim_in, dim_inner), jnp.float32),
        "b_pre": jnp.zeros((dim_inner,), jnp.float32),
        # mp layer 0: single-snapshot GCN
        "w_mp0": scale * jax.random.normal(ks[1], (dim_inner, dim_inner), jnp.float32),
        "b_mp0": jnp.zeros((dim_inner,), jnp.float32),
        # mp layer 1 (last): one GCN per snapshot, sum-aggregated
        "w_mp1": scale * jax.random.normal(
            ks[2], (num_snapshots, dim_inner, dim_inner), jnp.float32),
        "b_mp1": jnp.zeros((num_snapshots, dim_inner), jnp.float32),
        # post_mp node head: Linear
        "w_head": scale * jax.random.normal(ks[3], (dim_inner, dim_out), jnp.float32),
        "b_head": jnp.zeros((dim_out,), jnp.float32),
    }


# --------------------------------- main --------------------------------------

if __name__ == "__main__":
    key = jax.random.PRNGKey(0)
    N = 64           # number of nodes
    dim_in = 16      # input node feature dim
    dim_inner = 32   # cfg.gnn.dim_inner
    dim_out = 8      # output dim
    S = 2            # cfg.dynamic.num_snapshots
    E = 128          # edges per snapshot

    ks = jax.random.split(key, 8)
    x = jax.random.normal(ks[0], (N, dim_in), jnp.float32)

    # Build per-snapshot edge_index and dense normalized adjacencies (glue).
    edges = []
    adj_snaps = []
    for s in range(S):
        src = jax.random.randint(ks[1 + 2 * s], (E,), 0, N)
        dst = jax.random.randint(ks[2 + 2 * s], (E,), 0, N)
        ei = jnp.stack([src, dst])
        edges.append(ei)
        adj_snaps.append(gcn_norm_adj(ei, N))
    edge_index_full = jnp.concatenate(edges, axis=1)
    adj_full = gcn_norm_adj(edge_index_full, N)                 # (N, N)
    adj_snapshots = jnp.stack(adj_snaps)                        # (S, N, N)

    params = init_params(ks[7], dim_in, dim_inner, dim_out, S)

    out = gnn_forward(x, adj_full, adj_snapshots, params)
    jax.block_until_ready(out)
    assert out.shape == (N, dim_out) and out.dtype == jnp.float32
    assert bool(jnp.all(jnp.isfinite(out)))
    print("KERNEL_OK")
</pallas_src>

<mosaic_0001>
module attributes {stable_mosaic.version = 11 : i64} {
  func.func @_fused_gnn_kernel(%arg0: i32, %arg1: memref<64x16xf32, #tpu.memory_space<vmem>>, %arg2: memref<64x64xf32, #tpu.memory_space<vmem>>, %arg3: memref<2x64x64xf32, #tpu.memory_space<vmem>>, %arg4: memref<16x32xf32, #tpu.memory_space<vmem>>, %arg5: memref<1x32xf32, #tpu.memory_space<vmem>>, %arg6: memref<32x32xf32, #tpu.memory_space<vmem>>, %arg7: memref<1x32xf32, #tpu.memory_space<vmem>>, %arg8: memref<32x64xf32, #tpu.memory_space<vmem>>, %arg9: memref<1x32xf32, #tpu.memory_space<vmem>>, %arg10: memref<32x8xf32, #tpu.memory_space<vmem>>, %arg11: memref<1x8xf32, #tpu.memory_space<vmem>>, %arg12: memref<64x8xf32, #tpu.memory_space<vmem>>) attributes {dimension_semantics = [#tpu.dimension_semantics<arbitrary>], iteration_bounds = array<i64: 1>, scalar_prefetch = 0 : i64, scratch_operands = 0 : i64, tpu.core_type = #tpu.core_type<tc>, window_params = [{pipeline_mode = #tpu.pipeline_mode<synchronous>, transform_indices = @transform_0, window_bounds = array<i64: 64, 16>}, {pipeline_mode = #tpu.pipeline_mode<synchronous>, transform_indices = @transform_1, window_bounds = array<i64: 64, 64>}, {pipeline_mode = #tpu.pipeline_mode<synchronous>, transform_indices = @transform_2, window_bounds = array<i64: 2, 64, 64>}, {pipeline_mode = #tpu.pipeline_mode<synchronous>, transform_indices = @transform_3, window_bounds = array<i64: 16, 32>}, {pipeline_mode = #tpu.pipeline_mode<synchronous>, transform_indices = @transform_4, window_bounds = array<i64: 1, 32>}, {pipeline_mode = #tpu.pipeline_mode<synchronous>, transform_indices = @transform_5, window_bounds = array<i64: 32, 32>}, {pipeline_mode = #tpu.pipeline_mode<synchronous>, transform_indices = @transform_6, window_bounds = array<i64: 1, 32>}, {pipeline_mode = #tpu.pipeline_mode<synchronous>, transform_indices = @transform_7, window_bounds = array<i64: 32, 64>}, {pipeline_mode = #tpu.pipeline_mode<synchronous>, transform_indices = @transform_8, window_bounds = array<i64: 1, 32>}, {pipeline_mode = #tpu.pipeline_mode<synchronous>, transform_indices = @transform_9, window_bounds = array<i64: 32, 8>}, {pipeline_mode = #tpu.pipeline_mode<synchronous>, transform_indices = @transform_10, window_bounds = array<i64: 1, 8>}, {pipeline_mode = #tpu.pipeline_mode<synchronous>, transform_indices = @transform_11, window_bounds = array<i64: 64, 8>}]} {
    %c0 = arith.constant 0 : index
    %c0_0 = arith.constant 0 : index
    %0 = vector.load %arg1[%c0, %c0_0] : memref<64x16xf32, #tpu.memory_space<vmem>>, vector<64x16xf32>
    %c0_1 = arith.constant 0 : index
    %c0_2 = arith.constant 0 : index
    %1 = vector.load %arg4[%c0_1, %c0_2] : memref<16x32xf32, #tpu.memory_space<vmem>>, vector<16x32xf32>
    %cst = arith.constant dense<0.000000e+00> : vector<64x32xf32>
    %2 = tpu.matmul %0, %1, %cst {dimension_numbers = #tpu.dot_dimension_numbers<[1], [0], [0], [1], [0, 0, 1, 1], [], []>} : vector<64x16xf32>, vector<16x32xf32>, vector<64x32xf32> -> vector<64x32xf32>
    %c0_3 = arith.constant 0 : index
    %c0_4 = arith.constant 0 : index
    %3 = vector.load %arg5[%c0_3, %c0_4] : memref<1x32xf32, #tpu.memory_space<vmem>>, vector<1x32xf32>
    %4 = vector.broadcast %3 : vector<1x32xf32> to vector<64x32xf32>
    %5 = arith.addf %2, %4 : vector<64x32xf32>
    %cst_5 = arith.constant 0.000000e+00 : f32
    %6 = vector.broadcast %cst_5 : f32 to vector<64x32xf32>
    %7 = arith.maximumf %5, %6 : vector<64x32xf32>
    %c0_6 = arith.constant 0 : index
    %c0_7 = arith.constant 0 : index
    %8 = vector.load %arg6[%c0_6, %c0_7] : memref<32x32xf32, #tpu.memory_space<vmem>>, vector<32x32xf32>
    %cst_8 = arith.constant dense<0.000000e+00> : vector<64x32xf32>
    %9 = tpu.matmul %7, %8, %cst_8 {dimension_numbers = #tpu.dot_dimension_numbers<[1], [0], [0], [1], [0, 0, 1, 1], [], []>} : vector<64x32xf32>, vector<32x32xf32>, vector<64x32xf32> -> vector<64x32xf32>
    %c0_9 = arith.constant 0 : index
    %c0_10 = arith.constant 0 : index
    %10 = vector.load %arg2[%c0_9, %c0_10] : memref<64x64xf32, #tpu.memory_space<vmem>>, vector<64x64xf32>
    %cst_11 = arith.constant dense<0.000000e+00> : vector<64x32xf32>
    %11 = tpu.matmul %10, %9, %cst_11 {dimension_numbers = #tpu.dot_dimension_numbers<[1], [0], [0], [1], [0, 0, 1, 1], [], []>} : vector<64x64xf32>, vector<64x32xf32>, vector<64x32xf32> -> vector<64x32xf32>
    %c0_12 = arith.constant 0 : index
    %c0_13 = arith.constant 0 : index
    %12 = vector.load %arg7[%c0_12, %c0_13] : memref<1x32xf32, #tpu.memory_space<vmem>>, vector<1x32xf32>
    %13 = vector.broadcast %12 : vector<1x32xf32> to vector<64x32xf32>
    %14 = arith.addf %11, %13 : vector<64x32xf32>
    %cst_14 = arith.constant 0.000000e+00 : f32
    %15 = vector.broadcast %cst_14 : f32 to vector<64x32xf32>
    %16 = arith.maximumf %14, %15 : vector<64x32xf32>
    %17 = arith.mulf %16, %16 : vector<64x32xf32>
    %cst_15 = arith.constant dense<0.000000e+00> : vector<64xf32>
    %18 = vector.multi_reduction <add>, %17, %cst_15 [1] : vector<64x32xf32> to vector<64xf32>
    %19 = vector.shape_cast %18 : vector<64xf32> to vector<64x1xf32>
    %cst_16 = arith.constant 1.000000e-24 : f32
    %20 = vector.broadcast %cst_16 : f32 to vector<64x1xf32>
    %21 = arith.maximumf %19, %20 : vector<64x1xf32>
    %22 = math.rsqrt %21 : vector<64x1xf32>
    %23 = vector.broadcast %22 : vector<64x1xf32> to vector<64x32xf32>
    %24 = arith.mulf %16, %23 : vector<64x32xf32>
    %c0_17 = arith.constant 0 : index
    %c0_18 = arith.constant 0 : index
    %25 = vector.load %arg8[%c0_17, %c0_18] : memref<32x64xf32, #tpu.memory_space<vmem>>, vector<32x64xf32>
    %cst_19 = arith.constant dense<0.000000e+00> : vector<64x64xf32>
    %26 = tpu.matmul %24, %25, %cst_19 {dimension_numbers = #tpu.dot_dimension_numbers<[1], [0], [0], [1], [0, 0, 1, 1], [], []>} : vector<64x32xf32>, vector<32x64xf32>, vector<64x64xf32> -> vector<64x64xf32>
    %c0_20 = arith.constant 0 : index
    %c0_21 = arith.constant 0 : index
    %c0_22 = arith.constant 0 : index
    %27 = vector.load %arg3[%c0_20, %c0_21, %c0_22] : memref<2x64x64xf32, #tpu.memory_space<vmem>>, vector<1x64x64xf32>
    %28 = vector.shape_cast %27 : vector<1x64x64xf32> to vector<64x64xf32>
    %29 = vector.extract_strided_slice %26 {offsets = [0, 0], sizes = [64, 32], strides = [1, 1]} : vector<64x64xf32> to vector<64x32xf32>
    %cst_23 = arith.constant dense<0.000000e+00> : vector<64x32xf32>
    %30 = tpu.matmul %28, %29, %cst_23 {dimension_numbers = #tpu.dot_dimension_numbers<[1], [0], [0], [1], [0, 0, 1, 1], [], []>} : vector<64x64xf32>, vector<64x32xf32>, vector<64x32xf32> -> vector<64x32xf32>
    %c1 = arith.constant 1 : index
    %c0_24 = arith.constant 0 : index
    %c0_25 = arith.constant 0 : index
    %31 = vector.load %arg3[%c1, %c0_24, %c0_25] : memref<2x64x64xf32, #tpu.memory_space<vmem>>, vector<1x64x64xf32>
    %32 = vector.shape_cast %31 : vector<1x64x64xf32> to vector<64x64xf32>
    %33 = vector.extract_strided_slice %26 {offsets = [0, 32], sizes = [64, 32], strides = [1, 1]} : vector<64x64xf32> to vector<64x32xf32>
    %cst_26 = arith.constant dense<0.000000e+00> : vector<64x32xf32>
    %34 = tpu.matmul %32, %33, %cst_26 {dimension_numbers = #tpu.dot_dimension_numbers<[1], [0], [0], [1], [0, 0, 1, 1], [], []>} : vector<64x64xf32>, vector<64x32xf32>, vector<64x32xf32> -> vector<64x32xf32>
    %35 = arith.addf %30, %34 : vector<64x32xf32>
    %c0_27 = arith.constant 0 : index
    %c0_28 = arith.constant 0 : index
    %36 = vector.load %arg9[%c0_27, %c0_28] : memref<1x32xf32, #tpu.memory_space<vmem>>, vector<1x32xf32>
    %37 = vector.broadcast %36 : vector<1x32xf32> to vector<64x32xf32>
    %38 = arith.addf %35, %37 : vector<64x32xf32>
    %cst_29 = arith.constant 0.000000e+00 : f32
    %39 = vector.broadcast %cst_29 : f32 to vector<64x32xf32>
    %40 = arith.maximumf %38, %39 : vector<64x32xf32>
    %41 = arith.mulf %40, %40 : vector<64x32xf32>
    %cst_30 = arith.constant dense<0.000000e+00> : vector<64xf32>
    %42 = vector.multi_reduction <add>, %41, %cst_30 [1] : vector<64x32xf32> to vector<64xf32>
    %43 = vector.shape_cast %42 : vector<64xf32> to vector<64x1xf32>
    %cst_31 = arith.constant 1.000000e-24 : f32
    %44 = vector.broadcast %cst_31 : f32 to vector<64x1xf32>
    %45 = arith.maximumf %43, %44 : vector<64x1xf32>
    %46 = math.rsqrt %45 : vector<64x1xf32>
    %47 = vector.broadcast %46 : vector<64x1xf32> to vector<64x32xf32>
    %48 = arith.mulf %40, %47 : vector<64x32xf32>
    %c0_32 = arith.constant 0 : index
    %c0_33 = arith.constant 0 : index
    %49 = vector.load %arg10[%c0_32, %c0_33] : memref<32x8xf32, #tpu.memory_space<vmem>>, vector<32x8xf32>
    %cst_34 = arith.constant dense<0.000000e+00> : vector<64x8xf32>
    %50 = tpu.matmul %48, %49, %cst_34 {dimension_numbers = #tpu.dot_dimension_numbers<[1], [0], [0], [1], [0, 0, 1, 1], [], []>} : vector<64x32xf32>, vector<32x8xf32>, vector<64x8xf32> -> vector<64x8xf32>
    %c0_35 = arith.constant 0 : index
    %c0_36 = arith.constant 0 : index
    %51 = vector.load %arg11[%c0_35, %c0_36] : memref<1x8xf32, #tpu.memory_space<vmem>>, vector<1x8xf32>
    %52 = vector.broadcast %51 : vector<1x8xf32> to vector<64x8xf32>
    %53 = arith.addf %50, %52 : vector<64x8xf32>
    %c0_37 = arith.constant 0 : index
    %c0_38 = arith.constant 0 : index
    %54 = vector.load %arg12[%c0_37, %c0_38] : memref<64x8xf32, #tpu.memory_space<vmem>>, vector<64x8xf32>
    tpu.vector_store %arg12[%c0_37, %c0_38], %53 {strides = array<i32>} : memref<64x8xf32, #tpu.memory_space<vmem>>, vector<64x8xf32>,
    return
  }
  func.func @transform_0(%arg0: i32) -> (i32, i32) {
    %c0_i32 = arith.constant 0 : i32
    %c0_i32_0 = arith.constant 0 : i32
    %c0_i32_1 = arith.constant 0 : i32
    return %c0_i32, %c0_i32_0 : i32, i32
  }
  func.func @transform_1(%arg0: i32) -> (i32, i32) {
    %c0_i32 = arith.constant 0 : i32
    %c0_i32_0 = arith.constant 0 : i32
    %c0_i32_1 = arith.constant 0 : i32
    return %c0_i32, %c0_i32_0 : i32, i32
  }
  func.func @transform_2(%arg0: i32) -> (i32, i32, i32) {
    %c0_i32 = arith.constant 0 : i32
    %c0_i32_0 = arith.constant 0 : i32
    %c0_i32_1 = arith.constant 0 : i32
    %c0_i32_2 = arith.constant 0 : i32
    return %c0_i32, %c0_i32_0, %c0_i32_1 : i32, i32, i32
  }
  func.func @transform_3(%arg0: i32) -> (i32, i32) {
    %c0_i32 = arith.constant 0 : i32
    %c0_i32_0 = arith.constant 0 : i32
    %c0_i32_1 = arith.constant 0 : i32
    return %c0_i32, %c0_i32_0 : i32, i32
  }
  func.func @transform_4(%arg0: i32) -> (i32, i32) {
    %c0_i32 = arith.constant 0 : i32
    %c0_i32_0 = arith.constant 0 : i32
    %c0_i32_1 = arith.constant 0 : i32
    return %c0_i32, %c0_i32_0 : i32, i32
  }
  func.func @transform_5(%arg0: i32) -> (i32, i32) {
    %c0_i32 = arith.constant 0 : i32
    %c0_i32_0 = arith.constant 0 : i32
    %c0_i32_1 = arith.constant 0 : i32
    return %c0_i32, %c0_i32_0 : i32, i32
  }
  func.func @transform_6(%arg0: i32) -> (i32, i32) {
    %c0_i32 = arith.constant 0 : i32
    %c0_i32_0 = arith.constant 0 : i32
    %c0_i32_1 = arith.constant 0 : i32
    return %c0_i32, %c0_i32_0 : i32, i32
  }
  func.func @transform_7(%arg0: i32) -> (i32, i32) {
    %c0_i32 = arith.constant 0 : i32
    %c0_i32_0 = arith.constant 0 : i32
    %c0_i32_1 = arith.constant 0 : i32
    return %c0_i32, %c0_i32_0 : i32, i32
  }
  func.func @transform_8(%arg0: i32) -> (i32, i32) {
    %c0_i32 = arith.constant 0 : i32
    %c0_i32_0 = arith.constant 0 : i32
    %c0_i32_1 = arith.constant 0 : i32
    return %c0_i32, %c0_i32_0 : i32, i32
  }
  func.func @transform_9(%arg0: i32) -> (i32, i32) {
    %c0_i32 = arith.constant 0 : i32
    %c0_i32_0 = arith.constant 0 : i32
    %c0_i32_1 = arith.constant 0 : i32
    return %c0_i32, %c0_i32_0 : i32, i32
  }
  func.func @transform_10(%arg0: i32) -> (i32, i32) {
    %c0_i32 = arith.constant 0 : i32
    %c0_i32_0 = arith.constant 0 : i32
    %c0_i32_1 = arith.constant 0 : i32
    return %c0_i32, %c0_i32_0 : i32, i32
  }
  func.func @transform_11(%arg0: i32) -> (i32, i32) {
    %c0_i32 = arith.constant 0 : i32
    %c0_i32_0 = arith.constant 0 : i32
    %c0_i32_1 = arith.constant 0 : i32
    return %c0_i32, %c0_i32_0 : i32, i32
  }
}

</mosaic_0001>

<llo_original>
// kernel: tpu_custom_call.1
$region0: #{tpu_custom_call.1}
  #allocation0 [shape = 'u32[]', space=smem, size = 0x4, offset = 0x4, fixed_abs, tag = 'smem constant byte address 0x4 - core index']
  #allocation1 [shape = 'u32[144,128]{1,0:T(1,128)}', space=vmem, size = 0x12000, scoped, tag = 'internal scratch']
  %s0 = inlined_call_operand.vmem [shape: f32[64,16], index: 0, kind: input, shape index: {}]
  %s1 = inlined_call_operand.vmem [shape: f32[64,64], index: 1, kind: input, shape index: {}]
  %s2 = inlined_call_operand.hbm [shape: f32[2,64,64], index: 2, kind: input, shape index: {}]
  %s3 = inlined_call_operand.hbm [shape: f32[16,32], index: 3, kind: input, shape index: {}]
  %s4 = inlined_call_operand.vmem [shape: f32[1,32], index: 4, kind: input, shape index: {}]
  %s5 = inlined_call_operand.vmem [shape: f32[32,32], index: 5, kind: input, shape index: {}]
  %s6 = inlined_call_operand.vmem [shape: f32[1,32], index: 6, kind: input, shape index: {}]
  %s7 = inlined_call_operand.vmem [shape: f32[32,64], index: 7, kind: input, shape index: {}]
  %s8 = inlined_call_operand.vmem [shape: f32[1,32], index: 8, kind: input, shape index: {}]
  %s9 = inlined_call_operand.vmem [shape: f32[32,8], index: 9, kind: input, shape index: {}]
  %s10 = inlined_call_operand.vmem [shape: f32[1,8], index: 10, kind: input, shape index: {}]
  %s11 = inlined_call_operand.vmem [shape: f32[64,8], index: 11, kind: output, shape index: {}]
  %s12 = sld [smem:[#allocation0]]
  $region62: #{tpu_custom_call.1} parent=0
    _
  %s14 = ssub.s32 1, %s12
  %s15 = scalar_select 0, %s14, %s12
  $region1: #{tpu_custom_call.1} parent=0
    #allocation2 [shape = 'u8[65536]{0}', space=vmem, size = 0x10000, scoped, tag = 'input window, operand 2, single buffered']
    #allocation3 [shape = 's32[1]{0}', space=sflag, size = 0x4, scoped, tag = 'scoped memory for tpu_custom_call.1']
    #allocation4 [shape = 'u8[8192]{0}', space=vmem, size = 0x2000, scoped, tag = 'input window, operand 3, single buffered']
    #allocation5 [shape = 's32[1]{0}', space=sflag, size = 0x4, scoped, tag = 'scoped memory for tpu_custom_call.1']
    %16 = vsyncpa [#allocation3], 0
    %17 = vsyncpa [#allocation5], 0
    // Predicated region
    $region2: #{tpu_custom_call.1} parent=1 // pred_check
      _
    $region3: #{tpu_custom_call.1} parent=1 // pred_check_branch
      %19 = sbr.rel (0) target = $region5
    $region4: #{tpu_custom_call.1} parent=1 // pred_region
      _
    $region5: #{tpu_custom_call.1} parent=1 // pred_fallthru
      _
    // Predicated region
    $region6: #{tpu_custom_call.1} parent=1 // pred_check
      _
    $region7: #{tpu_custom_call.1} parent=1 // pred_check_branch
      %21 = sbr.rel (0) target = $region9
    $region8: #{tpu_custom_call.1} parent=1 // pred_region
      _
    $region9: #{tpu_custom_call.1} parent=1 // pred_fallthru
      _
    // Predicated region
    $region10: #{tpu_custom_call.1} parent=1 // pred_check
      _
    $region11: #{tpu_custom_call.1} parent=1 // pred_check_branch
      %23 = sbr.rel (0) target = $region13
    $region12: #{tpu_custom_call.1} parent=1 // pred_region
      %s25 = ssub.s32 2048, 2048
      %26 = vsyncadd [#allocation3], %s25
      %s27 = sshll.u32 [#allocation2], 4
      %s28 = int_to_ptr.vmem [resolvable:$true] %s27
      %33 = dma.hbm_to_vmem [thread:$0]  %s2, 2048, %s28, [#allocation3], 128, 128, 8
    $region13: #{tpu_custom_call.1} parent=1 // pred_fallthru
      _
    // Predicated region
    $region14: #{tpu_custom_call.1} parent=1 // pred_check
      _
    $region15: #{tpu_custom_call.1} parent=1 // pred_check_branch
      %35 = sbr.rel (0) target = $region17
    $region16: #{tpu_custom_call.1} parent=1 // pred_region
      %s37 = ssub.s32 256, 256
      %38 = vsyncadd [#allocation5], %s37
      %s39 = sshll.u32 [#allocation4], 4
      %s40 = int_to_ptr.vmem [resolvable:$true] %s39
      %45 = dma.hbm_to_vmem [thread:$0]  %s3, 256, %s40, [#allocation5], 128, 128, 8
    $region17: #{tpu_custom_call.1} parent=1 // pred_fallthru
      _
    // Predicated region
    $region18: #{tpu_custom_call.1} parent=1 // pred_check
      _
    $region19: #{tpu_custom_call.1} parent=1 // pred_check_branch
      %47 = sbr.rel (0) target = $region21
    $region20: #{tpu_custom_call.1} parent=1 // pred_region
      _
    $region21: #{tpu_custom_call.1} parent=1 // pred_fallthru
      _
    // Predicated region
    $region22: #{tpu_custom_call.1} parent=1 // pred_check
      _
    $region23: #{tpu_custom_call.1} parent=1 // pred_check_branch
      %49 = sbr.rel (0) target = $region25
    $region24: #{tpu_custom_call.1} parent=1 // pred_region
      _
    $region25: #{tpu_custom_call.1} parent=1 // pred_fallthru
      _
    // Predicated region
    $region26: #{tpu_custom_call.1} parent=1 // pred_check
      _
    $region27: #{tpu_custom_call.1} parent=1 // pred_check_branch
      %51 = sbr.rel (0) target = $region29
    $region28: #{tpu_custom_call.1} parent=1 // pred_region
      _
    $region29: #{tpu_custom_call.1} parent=1 // pred_fallthru
      _
    // Predicated region
    $region30: #{tpu_custom_call.1} parent=1 // pred_check
      _
    $region31: #{tpu_custom_call.1} parent=1 // pred_check_branch
      %53 = sbr.rel (0) target = $region33
    $region32: #{tpu_custom_call.1} parent=1 // pred_region
      _
    $region33: #{tpu_custom_call.1} parent=1 // pred_fallthru
      _
    // Predicated region
    $region34: #{tpu_custom_call.1} parent=1 // pred_check
      _
    $region35: #{tpu_custom_call.1} parent=1 // pred_check_branch
      %55 = sbr.rel (0) target = $region37
    $region36: #{tpu_custom_call.1} parent=1 // pred_region
      _
    $region37: #{tpu_custom_call.1} parent=1 // pred_fallthru
      _
    // Predicated region
    $region38: #{tpu_custom_call.1} parent=1 // pred_check
      _
    $region39: #{tpu_custom_call.1} parent=1 // pred_check_branch
      %57 = sbr.rel (0) target = $region41
    $region40: #{tpu_custom_call.1} parent=1 // pred_region
      _
    $region41: #{tpu_custom_call.1} parent=1 // pred_fallthru
      _
    // Predicated region
    $region42: #{tpu_custom_call.1} parent=1 // pred_check
      _
    $region43: #{tpu_custom_call.1} parent=1 // pred_check_branch
      %59 = sbr.rel (0) target = $region45
    $region44: #{tpu_custom_call.1} parent=1 // pred_region
      _
    $region45: #{tpu_custom_call.1} parent=1 // pred_fallthru
      _
    // Predicated region
    $region46: #{tpu_custom_call.1} parent=1 // pred_check
      _
    $region47: #{tpu_custom_call.1} parent=1 // pred_check_branch
      %61 = sbr.rel (0) target = $region49
    $region48: #{tpu_custom_call.1} parent=1 // pred_region
      %62 = dma.done [#allocation3], 2048
    $region49: #{tpu_custom_call.1} parent=1 // pred_fallthru
      _
    // Predicated region
    $region50: #{tpu_custom_call.1} parent=1 // pred_check
      _
    $region51: #{tpu_custom_call.1} parent=1 // pred_check_branch
      %64 = sbr.rel (0) target = $region53
    $region52: #{tpu_custom_call.1} parent=1 // pred_region
      %65 = dma.done [#allocation5], 256
    $region53: #{tpu_custom_call.1} parent=1 // pred_fallthru
      _
    %v66 = vld [vmem:[%s0] sm:$0xff]
    %v67 = vld [vmem:[%s0 + $0x8] sm:$0xff]
    %v68 = vld [vmem:[%s0 + $0x10] sm:$0xff]
    %v69 = vld [vmem:[%s0 + $0x18] sm:$0xff]
    %v70 = vld [vmem:[%s0 + $0x20] sm:$0xff]
    %v71 = vld [vmem:[%s0 + $0x28] sm:$0xff]
    %v72 = vld [vmem:[%s0 + $0x30] sm:$0xff]
    %v73 = vld [vmem:[%s0 + $0x38] sm:$0xff]
    %v74 = vld [vmem:[#allocation4] sm:$0xff]
    %v75 = vld [vmem:[#allocation4 + $0x8] sm:$0xff]
    %v76 = vld [vmem:[%s4] sm:$0x1]
    %v78 = vlaneseq
    %v79 = vshrl.u32 %v78, 7
    %v80 = vsub.s32 0, %v79
    %v81 = vrot.slane %v76, %v80
    %vm83 = vcmask 130048
    %v85 = vsel %vm83, %v66, 0
    %v88 = vsel %vm83, %v67, 0
    %v91 = vsel %vm83, %v68, 0
    %v94 = vsel %vm83, %v69, 0
    %v97 = vsel %vm83, %v70, 0
    %v100 = vsel %vm83, %v71, 0
    %v103 = vsel %vm83, %v72, 0
    %v106 = vsel %vm83, %v73, 0
    %108 = vmatprep.subr.mxu0 0.0
    %109 = vmatpush1.msra.mxu0 %v74
    %110 = vmatprep.subr.mxu0 0.0
    %111 = vmatpush1.msra.mxu0 %v75
    %112 = vmatprep.subr.mxu0 0.0
    %113 = vmatpush1.msra.mxu0 0.0
    %114 = vmatprep.subr.mxu0 0.0
    %115 = vmatpush1.msra.mxu0 0.0
    %116 = vmatprep.subr.mxu0 0.0
    %117 = vmatpush1.msra.mxu0 0.0
    %118 = vmatprep.subr.mxu0 0.0
    %119 = vmatpush1.msra.mxu0 0.0
    %120 = vmatprep.subr.mxu0 0.0
    %121 = vmatpush1.msra.mxu0 0.0
    %122 = vmatprep.subr.mxu0 0.0
    %123 = vmatpush1.msra.mxu0 0.0
    %124 = vmatprep.subr.mxu0 0.0
    %125 = vmatpush1.msra.mxu0 0.0
    %126 = vmatprep.subr.mxu0 0.0
    %127 = vmatpush1.msra.mxu0 0.0
    %128 = vmatprep.subr.mxu0 0.0
    %129 = vmatpush1.msra.mxu0 0.0
    %130 = vmatprep.subr.mxu0 0.0
    %131 = vmatpush1.msra.mxu0 0.0
    %132 = vmatprep.subr.mxu0 0.0
    %133 = vmatpush1.msra.mxu0 0.0
    %134 = vmatprep.subr.mxu0 0.0
    %135 = vmatpush1.msra.mxu0 0.0
    %136 = vmatprep.subr.mxu0 0.0
    %137 = vmatpush1.msra.mxu0 0.0
    %138 = vmatprep.subr.mxu0 0.0
    %139 = vmatpush1.msra.mxu0 0.0
    %140 = vmatprep.subr.mxu0 0.0
    %141 = vmatpush1.msra.mxu0 0.0
    %142 = vmatprep.subr.mxu0 0.0
    %143 = vmatpush1.msra.mxu0 0.0
    %144 = vmatprep.subr.mxu0 0.0
    %145 = vmatpush1.msra.mxu0 0.0
    %146 = vmatprep.subr.mxu0 0.0
    %147 = vmatpush1.msra.mxu0 0.0
    %148 = vmatprep.subr.mxu0 0.0
    %149 = vmatpush1.msra.mxu0 0.0
    %150 = vmatprep.subr.mxu0 0.0
    %151 = vmatpush1.msra.mxu0 0.0
    %152 = vmatprep.subr.mxu0 0.0
    %153 = vmatpush1.msra.mxu0 0.0
    %154 = vmatprep.subr.mxu0 0.0
    %155 = vmatpush1.msra.mxu0 0.0
    %156 = vmatprep.subr.mxu0 0.0
    %157 = vmatpush1.msra.mxu0 0.0
    %158 = vmatprep.subr.mxu0 0.0
    %159 = vmatpush1.msra.mxu0 0.0
    %160 = vmatprep.subr.mxu0 0.0
    %161 = vmatpush1.msra.mxu0 0.0
    %162 = vmatprep.subr.mxu0 0.0
    %163 = vmatpush1.msra.mxu0 0.0
    %164 = vmatprep.subr.mxu0 0.0
    %165 = vmatpush1.msra.mxu0 0.0
    %166 = vmatprep.subr.mxu0 0.0
    %167 = vmatpush1.msra.mxu0 0.0
    %168 = vmatprep.subr.mxu0 0.0
    %169 = vmatpush1.msra.mxu0 0.0
    %170 = vmatprep.subr.mxu0 0.0
    %171 = vmatpush1.msra.mxu0 0.0
    %172 = vmatprep.mubr.f32.mxu0 0.0
    %173 = vmatmul.mubr.f32.gmra.mrb[0].mxu0 %v85
    %v174 = vpop.f32.mrb[0].mxu0
    %v175 = vadd.f32 %v81, %v174
    %v176 = vpop.f32.mrb[0].mxu0
    %177 = vmatprep.mubr.f32.mxu0 0.0
    %178 = vmatmul.mubr.f32.gmra.mrb[0].mxu0 %v88
    %v179 = vpop.f32.mrb[0].mxu0
    %v180 = vadd.f32 %v81, %v179
    %v181 = vpop.f32.mrb[0].mxu0
    %182 = vmatprep.mubr.f32.mxu0 0.0
    %183 = vmatmul.mubr.f32.gmra.mrb[0].mxu0 %v91
    %v184 = vpop.f32.mrb[0].mxu0
    %v185 = vadd.f32 %v81, %v184
    %v186 = vpop.f32.mrb[0].mxu0
    %187 = vmatprep.mubr.f32.mxu0 0.0
    %188 = vmatmul.mubr.f32.gmra.mrb[0].mxu0 %v94
    %v189 = vpop.f32.mrb[0].mxu0
    %v190 = vadd.f32 %v81, %v189
    %v191 = vpop.f32.mrb[0].mxu0
    %192 = vmatprep.mubr.f32.mxu0 0.0
    %193 = vmatmul.mubr.f32.gmra.mrb[0].mxu0 %v97
    %v194 = vpop.f32.mrb[0].mxu0
    %v195 = vadd.f32 %v81, %v194
    %v196 = vpop.f32.mrb[0].mxu0
    %197 = vmatprep.mubr.f32.mxu0 0.0
    %198 = vmatmul.mubr.f32.gmra.mrb[0].mxu0 %v100
    %v199 = vpop.f32.mrb[0].mxu0
    %v200 = vadd.f32 %v81, %v199
    %v201 = vpop.f32.mrb[0].mxu0
    %202 = vmatprep.mubr.f32.mxu0 0.0
    %203 = vmatmul.mubr.f32.gmra.mrb[0].mxu0 %v103
    %v204 = vpop.f32.mrb[0].mxu0
    %v205 = vadd.f32 %v81, %v204
    %v206 = vpop.f32.mrb[0].mxu0
    %207 = vmatprep.mubr.f32.mxu0 0.0
    %208 = vmatmul.mubr.f32.gmra.mrb[0].mxu0 %v106
    %v209 = vpop.f32.mrb[0].mxu0
    %v210 = vadd.f32 %v81, %v209
    %v211 = vpop.f32.mrb[0].mxu0
    %212 = vdwg.mxu0
    %v213 = vmax.f32 %v175, 0.0
    %v214 = vmax.f32 %v180, 0.0
    %v215 = vmax.f32 %v185, 0.0
    %v216 = vmax.f32 %v190, 0.0
    %v217 = vmax.f32 %v195, 0.0
    %v218 = vmax.f32 %v200, 0.0
    %v219 = vmax.f32 %v205, 0.0
    %v220 = vmax.f32 %v210, 0.0
    %v221 = vld [vmem:[%s5] sm:$0xff]
    %v222 = vld [vmem:[%s5 + $0x8] sm:$0xff]
    %v223 = vld [vmem:[%s5 + $0x10] sm:$0xff]
    %v224 = vld [vmem:[%s5 + $0x18] sm:$0xff]
    %vm225 = vcmask 261120
    %v227 = vsel %vm225, %v213, 0
    %v230 = vsel %vm225, %v214, 0
    %v233 = vsel %vm225, %v215, 0
    %v236 = vsel %vm225, %v216, 0
    %v239 = vsel %vm225, %v217, 0
    %v242 = vsel %vm225, %v218, 0
    %v245 = vsel %vm225, %v219, 0
    %v248 = vsel %vm225, %v220, 0
    %250 = vmatprep.subr.mxu0 0.0
    %251 = vmatpush1.msra.mxu0 %v221
    %252 = vmatprep.subr.mxu0 0.0
    %253 = vmatpush1.msra.mxu0 %v222
    %254 = vmatprep.subr.mxu0 0.0
    %255 = vmatpush1.msra.mxu0 %v223
    %256 = vmatprep.subr.mxu0 0.0
    %257 = vmatpush1.msra.mxu0 %v224
    %258 = vmatprep.subr.mxu0 0.0
    %259 = vmatpush1.msra.mxu0 0.0
    %260 = vmatprep.subr.mxu0 0.0
    %261 = vmatpush1.msra.mxu0 0.0
    %262 = vmatprep.subr.mxu0 0.0
    %263 = vmatpush1.msra.mxu0 0.0
    %264 = vmatprep.subr.mxu0 0.0
    %265 = vmatpush1.msra.mxu0 0.0
    %266 = vmatprep.subr.mxu0 0.0
    %267 = vmatpush1.msra.mxu0 0.0
    %268 = vmatprep.subr.mxu0 0.0
    %269 = vmatpush1.msra.mxu0 0.0
    %270 = vmatprep.subr.mxu0 0.0
    %271 = vmatpush1.msra.mxu0 0.0
    %272 = vmatprep.subr.mxu0 0.0
    %273 = vmatpush1.msra.mxu0 0.0
    %274 = vmatprep.subr.mxu0 0.0
    %275 = vmatpush1.msra.mxu0 0.0
    %276 = vmatprep.subr.mxu0 0.0
    %277 = vmatpush1.msra.mxu0 0.0
    %278 = vmatprep.subr.mxu0 0.0
    %279 = vmatpush1.msra.mxu0 0.0
    %280 = vmatprep.subr.mxu0 0.0
    %281 = vmatpush1.msra.mxu0 0.0
    %282 = vmatprep.subr.mxu0 0.0
    %283 = vmatpush1.msra.mxu0 0.0
    %284 = vmatprep.subr.mxu0 0.0
    %285 = vmatpush1.msra.mxu0 0.0
    %286 = vmatprep.subr.mxu0 0.0
    %287 = vmatpush1.msra.mxu0 0.0
    %288 = vmatprep.subr.mxu0 0.0
    %289 = vmatpush1.msra.mxu0 0.0
    %290 = vmatprep.subr.mxu0 0.0
    %291 = vmatpush1.msra.mxu0 0.0
    %292 = vmatprep.subr.mxu0 0.0
    %293 = vmatpush1.msra.mxu0 0.0
    %294 = vmatprep.subr.mxu0 0.0
    %295 = vmatpush1.msra.mxu0 0.0
    %296 = vmatprep.subr.mxu0 0.0
    %297 = vmatpush1.msra.mxu0 0.0
    %298 = vmatprep.subr.mxu0 0.0
    %299 = vmatpush1.msra.mxu0 0.0
    %300 = vmatprep.subr.mxu0 0.0
    %301 = vmatpush1.msra.mxu0 0.0
    %302 = vmatprep.subr.mxu0 0.0
    %303 = vmatpush1.msra.mxu0 0.0
    %304 = vmatprep.subr.mxu0 0.0
    %305 = vmatpush1.msra.mxu0 0.0
    %306 = vmatprep.subr.mxu0 0.0
    %307 = vmatpush1.msra.mxu0 0.0
    %308 = vmatprep.subr.mxu0 0.0
    %309 = vmatpush1.msra.mxu0 0.0
    %310 = vmatprep.subr.mxu0 0.0
    %311 = vmatpush1.msra.mxu0 0.0
    %312 = vmatprep.subr.mxu0 0.0
    %313 = vmatpush1.msra.mxu0 0.0
    %314 = vmatprep.mubr.f32.mxu0 0.0
    %315 = vmatmul.mubr.f32.gmra.mrb[0].mxu0 %v227
    %v316 = vpop.f32.mrb[0].mxu0
    %v317 = vadd.f32 0.0, %v316
    %v318 = vpop.f32.mrb[0].mxu0
    %319 = vmatprep.mubr.f32.mxu0 0.0
    %320 = vmatmul.mubr.f32.gmra.mrb[0].mxu0 %v230
    %v321 = vpop.f32.mrb[0].mxu0
    %v322 = vadd.f32 0.0, %v321
    %v323 = vpop.f32.mrb[0].mxu0
    %324 = vmatprep.mubr.f32.mxu0 0.0
    %325 = vmatmul.mubr.f32.gmra.mrb[0].mxu0 %v233
    %v326 = vpop.f32.mrb[0].mxu0
    %v327 = vadd.f32 0.0, %v326
    %v328 = vpop.f32.mrb[0].mxu0
    %329 = vmatprep.mubr.f32.mxu0 0.0
    %330 = vmatmul.mubr.f32.gmra.mrb[0].mxu0 %v236
    %v331 = vpop.f32.mrb[0].mxu0
    %v332 = vadd.f32 0.0, %v331
    %v333 = vpop.f32.mrb[0].mxu0
    %334 = vmatprep.mubr.f32.mxu0 0.0
    %335 = vmatmul.mubr.f32.gmra.mrb[0].mxu0 %v239
    %v336 = vpop.f32.mrb[0].mxu0
    %v337 = vadd.f32 0.0, %v336
    %v338 = vpop.f32.mrb[0].mxu0
    %339 = vmatprep.mubr.f32.mxu0 0.0
    %340 = vmatmul.mubr.f32.gmra.mrb[0].mxu0 %v242
    %v341 = vpop.f32.mrb[0].mxu0
    %v342 = vadd.f32 0.0, %v341
    %v343 = vpop.f32.mrb[0].mxu0
    %344 = vmatprep.mubr.f32.mxu0 0.0
    %345 = vmatmul.mubr.f32.gmra.mrb[0].mxu0 %v245
    %v346 = vpop.f32.mrb[0].mxu0
    %v347 = vadd.f32 0.0, %v346
    %v348 = vpop.f32.mrb[0].mxu0
    %349 = vmatprep.mubr.f32.mxu0 0.0
    %350 = vmatmul.mubr.f32.gmra.mrb[0].mxu0 %v248
    %v351 = vpop.f32.mrb[0].mxu0
    %v352 = vadd.f32 0.0, %v351
    %v353 = vpop.f32.mrb[0].mxu0
    %354 = vdwg.mxu0
    %v355 = vld [vmem:[%s1] sm:$0xff]
    %v356 = vld [vmem:[%s1 + $0x8] sm:$0xff]
    %v357 = vld [vmem:[%s1 + $0x10] sm:$0xff]
    %v358 = vld [vmem:[%s1 + $0x18] sm:$0xff]
    %v359 = vld [vmem:[%s1 + $0x20] sm:$0xff]
    %v360 = vld [vmem:[%s1 + $0x28] sm:$0xff]
    %v361 = vld [vmem:[%s1 + $0x30] sm:$0xff]
    %v362 = vld [vmem:[%s1 + $0x38] sm:$0xff]
    %v363 = vld [vmem:[%s6] sm:$0x1]
    %v365 = vlaneseq
    %v366 = vshrl.u32 %v365, 7
    %v367 = vsub.s32 0, %v366
    %v368 = vrot.slane %v363, %v367
    %vm370 = vcmask 523264
    %v372 = vsel %vm370, %v355, 0
    %v375 = vsel %vm370, %v356, 0
    %v378 = vsel %vm370, %v357, 0
    %v381 = vsel %vm370, %v358, 0
    %v384 = vsel %vm370, %v359, 0
    %v387 = vsel %vm370, %v360, 0
    %v390 = vsel %vm370, %v361, 0
    %v393 = vsel %vm370, %v362, 0
    %395 = vmatprep.subr.mxu0 0.0
    %396 = vmatpush1.msra.mxu0 %v317
    %397 = vmatprep.subr.mxu0 0.0
    %398 = vmatpush1.msra.mxu0 %v322
    %399 = vmatprep.subr.mxu0 0.0
    %400 = vmatpush1.msra.mxu0 %v327
    %401 = vmatprep.subr.mxu0 0.0
    %402 = vmatpush1.msra.mxu0 %v332
    %403 = vmatprep.subr.mxu0 0.0
    %404 = vmatpush1.msra.mxu0 %v337
    %405 = vmatprep.subr.mxu0 0.0
    %406 = vmatpush1.msra.mxu0 %v342
    %407 = vmatprep.subr.mxu0 0.0
    %408 = vmatpush1.msra.mxu0 %v347
    %409 = vmatprep.subr.mxu0 0.0
    %410 = vmatpush1.msra.mxu0 %v352
    %411 = vmatprep.subr.mxu0 0.0
    %412 = vmatpush1.msra.mxu0 0.0
    %413 = vmatprep.subr.mxu0 0.0
    %414 = vmatpush1.msra.mxu0 0.0
    %415 = vmatprep.subr.mxu0 0.0
    %416 = vmatpush1.msra.mxu0 0.0
    %417 = vmatprep.subr.mxu0 0.0
    %418 = vmatpush1.msra.mxu0 0.0
    %419 = vmatprep.subr.mxu0 0.0
    %420 = vmatpush1.msra.mxu0 0.0
    %421 = vmatprep.subr.mxu0 0.0
    %422 = vmatpush1.msra.mxu0 0.0
    %423 = vmatprep.subr.mxu0 0.0
    %424 = vmatpush1.msra.mxu0 0.0
    %425 = vmatprep.subr.mxu0 0.0
    %426 = vmatpush1.msra.mxu0 0.0
    %427 = vmatprep.subr.mxu0 0.0
    %428 = vmatpush1.msra.mxu0 0.0
    %429 = vmatprep.subr.mxu0 0.0
    %430 = vmatpush1.msra.mxu0 0.0
    %431 = vmatprep.subr.mxu0 0.0
    %432 = vmatpush1.msra.mxu0 0.0
    %433 = vmatprep.subr.mxu0 0.0
    %434 = vmatpush1.msra.mxu0 0.0
    %435 = vmatprep.subr.mxu0 0.0
    %436 = vmatpush1.msra.mxu0 0.0
    %437 = vmatprep.subr.mxu0 0.0
    %438 = vmatpush1.msra.mxu0 0.0
    %439 = vmatprep.subr.mxu0 0.0
    %440 = vmatpush1.msra.mxu0 0.0
    %441 = vmatprep.subr.mxu0 0.0
    %442 = vmatpush1.msra.mxu0 0.0
    %443 = vmatprep.subr.mxu0 0.0
    %444 = vmatpush1.msra.mxu0 0.0
    %445 = vmatprep.subr.mxu0 0.0
    %446 = vmatpush1.msra.mxu0 0.0
    %447 = vmatprep.subr.mxu0 0.0
    %448 = vmatpush1.msra.mxu0 0.0
    %449 = vmatprep.subr.mxu0 0.0
    %450 = vmatpush1.msra.mxu0 0.0
    %451 = vmatprep.subr.mxu0 0.0
    %452 = vmatpush1.msra.mxu0 0.0
    %453 = vmatprep.subr.mxu0 0.0
    %454 = vmatpush1.msra.mxu0 0.0
    %455 = vmatprep.subr.mxu0 0.0
    %456 = vmatpush1.msra.mxu0 0.0
    %457 = vmatprep.subr.mxu0 0.0
    %458 = vmatpush1.msra.mxu0 0.0
    %459 = vmatprep.mubr.f32.mxu0 0.0
    %460 = vmatmul.mubr.f32.gmra.mrb[0].mxu0 %v372
    %v461 = vpop.f32.mrb[0].mxu0
    %v462 = vadd.f32 %v368, %v461
    %v463 = vpop.f32.mrb[0].mxu0
    %464 = vmatprep.mubr.f32.mxu0 0.0
    %465 = vmatmul.mubr.f32.gmra.mrb[0].mxu0 %v375
    %v466 = vpop.f32.mrb[0].mxu0
    %v467 = vadd.f32 %v368, %v466
    %v468 = vpop.f32.mrb[0].mxu0
    %469 = vmatprep.mubr.f32.mxu0 0.0
    %470 = vmatmul.mubr.f32.gmra.mrb[0].mxu0 %v378
    %v471 = vpop.f32.mrb[0].mxu0
    %v472 = vadd.f32 %v368, %v471
    %v473 = vpop.f32.mrb[0].mxu0
    %474 = vmatprep.mubr.f32.mxu0 0.0
    %475 = vmatmul.mubr.f32.gmra.mrb[0].mxu0 %v381
    %v476 = vpop.f32.mrb[0].mxu0
    %v477 = vadd.f32 %v368, %v476
    %v478 = vpop.f32.mrb[0].mxu0
    %479 = vmatprep.mubr.f32.mxu0 0.0
    %480 = vmatmul.mubr.f32.gmra.mrb[0].mxu0 %v384
    %v481 = vpop.f32.mrb[0].mxu0
    %v482 = vadd.f32 %v368, %v481
    %v483 = vpop.f32.mrb[0].mxu0
    %484 = vmatprep.mubr.f32.mxu0 0.0
    %485 = vmatmul.mubr.f32.gmra.mrb[0].mxu0 %v387
    %v486 = vpop.f32.mrb[0].mxu0
    %v487 = vadd.f32 %v368, %v486
    %v488 = vpop.f32.mrb[0].mxu0
    %489 = vmatprep.mubr.f32.mxu0 0.0
    %490 = vmatmul.mubr.f32.gmra.mrb[0].mxu0 %v390
    %v491 = vpop.f32.mrb[0].mxu0
    %v492 = vadd.f32 %v368, %v491
    %v493 = vpop.f32.mrb[0].mxu0
    %494 = vmatprep.mubr.f32.mxu0 0.0
    %495 = vmatmul.mubr.f32.gmra.mrb[0].mxu0 %v393
    %v496 = vpop.f32.mrb[0].mxu0
    %v497 = vadd.f32 %v368, %v496
    %v498 = vpop.f32.mrb[0].mxu0
    %499 = vdwg.mxu0
    %v500 = vmax.f32 %v462, 0.0
    %v501 = vmax.f32 %v467, 0.0
    %v502 = vmax.f32 %v472, 0.0
    %v503 = vmax.f32 %v477, 0.0
    %v504 = vmax.f32 %v482, 0.0
    %v505 = vmax.f32 %v487, 0.0
    %v506 = vmax.f32 %v492, 0.0
    %v507 = vmax.f32 %v497, 0.0
    %v508 = vmul.f32 %v500, %v500
    %v509 = vmul.f32 %v501, %v501
    %v510 = vmul.f32 %v502, %v502
    %v511 = vmul.f32 %v503, %v503
    %v512 = vmul.f32 %v504, %v504
    %v513 = vmul.f32 %v505, %v505
    %v514 = vmul.f32 %v506, %v506
    %v515 = vmul.f32 %v507, %v507
    %v516 = vsel %vm225, %v508, 0.0
    %517 = vadd.xlane.f32.xlu0 %v516
    %v518 = vpop.xlane.xlu0 %517
    %v519 = vsel %vm225, %v509, 0.0
    %520 = vadd.xlane.f32.xlu0 %v519
    %v521 = vpop.xlane.xlu0 %520
    %v522 = vsel %vm225, %v510, 0.0
    %523 = vadd.xlane.f32.xlu0 %v522
    %v524 = vpop.xlane.xlu0 %523
    %v525 = vsel %vm225, %v511, 0.0
    %526 = vadd.xlane.f32.xlu0 %v525
    %v527 = vpop.xlane.xlu0 %526
    %v528 = vsel %vm225, %v512, 0.0
    %529 = vadd.xlane.f32.xlu0 %v528
    %v530 = vpop.xlane.xlu0 %529
    %v531 = vsel %vm225, %v513, 0.0
    %532 = vadd.xlane.f32.xlu0 %v531
    %v533 = vpop.xlane.xlu0 %532
    %v534 = vsel %vm225, %v514, 0.0
    %535 = vadd.xlane.f32.xlu0 %v534
    %v536 = vpop.xlane.xlu0 %535
    %v537 = vsel %vm225, %v515, 0.0
    %538 = vadd.xlane.f32.xlu0 %v537
    %v539 = vpop.xlane.xlu0 %538
    %v540 = vmax.f32 %v518, 1e-24
    %v541 = vmax.f32 %v521, 1e-24
    %v542 = vmax.f32 %v524, 1e-24
    %v543 = vmax.f32 %v527, 1e-24
    %v544 = vmax.f32 %v530, 1e-24
    %v545 = vmax.f32 %v533, 1e-24
    %v546 = vmax.f32 %v536, 1e-24
    %v547 = vmax.f32 %v539, 1e-24
    %v548 = vrsqrt.pop %v540
    %v549 = vrsqrt.pop %v541
    %v550 = vrsqrt.pop %v542
    %v551 = vrsqrt.pop %v543
    %v552 = vrsqrt.pop %v544
    %v553 = vrsqrt.pop %v545
    %v554 = vrsqrt.pop %v546
    %v555 = vrsqrt.pop %v547
    %v556 = vmul.f32 %v500, %v548
    %v557 = vmul.f32 %v501, %v549
    %v558 = vmul.f32 %v502, %v550
    %v559 = vmul.f32 %v503, %v551
    %v560 = vmul.f32 %v504, %v552
    %v561 = vmul.f32 %v505, %v553
    %v562 = vmul.f32 %v506, %v554
    %v563 = vmul.f32 %v507, %v555
    %v564 = vld [vmem:[%s7] sm:$0xff]
    %v565 = vld [vmem:[%s7 + $0x8] sm:$0xff]
    %v566 = vld [vmem:[%s7 + $0x10] sm:$0xff]
    %v567 = vld [vmem:[%s7 + $0x18] sm:$0xff]
    %v569 = vsel %vm225, %v556, 0
    %v572 = vsel %vm225, %v557, 0
    %v575 = vsel %vm225, %v558, 0
    %v578 = vsel %vm225, %v559, 0
    %v581 = vsel %vm225, %v560, 0
    %v584 = vsel %vm225, %v561, 0
    %v587 = vsel %vm225, %v562, 0
    %v590 = vsel %vm225, %v563, 0
    %592 = vmatprep.subr.mxu0 0.0
    %593 = vmatpush1.msra.mxu0 %v564
    %594 = vmatprep.subr.mxu0 0.0
    %595 = vmatpush1.msra.mxu0 %v565
    %596 = vmatprep.subr.mxu0 0.0
    %597 = vmatpush1.msra.mxu0 %v566
    %598 = vmatprep.subr.mxu0 0.0
    %599 = vmatpush1.msra.mxu0 %v567
    %600 = vmatprep.subr.mxu0 0.0
    %601 = vmatpush1.msra.mxu0 0.0
    %602 = vmatprep.subr.mxu0 0.0
    %603 = vmatpush1.msra.mxu0 0.0
    %604 = vmatprep.subr.mxu0 0.0
    %605 = vmatpush1.msra.mxu0 0.0
    %606 = vmatprep.subr.mxu0 0.0
    %607 = vmatpush1.msra.mxu0 0.0
    %608 = vmatprep.subr.mxu0 0.0
    %609 = vmatpush1.msra.mxu0 0.0
    %610 = vmatprep.subr.mxu0 0.0
    %611 = vmatpush1.msra.mxu0 0.0
    %612 = vmatprep.subr.mxu0 0.0
    %613 = vmatpush1.msra.mxu0 0.0
    %614 = vmatprep.subr.mxu0 0.0
    %615 = vmatpush1.msra.mxu0 0.0
    %616 = vmatprep.subr.mxu0 0.0
    %617 = vmatpush1.msra.mxu0 0.0
    %618 = vmatprep.subr.mxu0 0.0
    %619 = vmatpush1.msra.mxu0 0.0
    %620 = vmatprep.subr.mxu0 0.0
    %621 = vmatpush1.msra.mxu0 0.0
    %622 = vmatprep.subr.mxu0 0.0
    %623 = vmatpush1.msra.mxu0 0.0
    %624 = vmatprep.subr.mxu0 0.0
    %625 = vmatpush1.msra.mxu0 0.0
    %626 = vmatprep.subr.mxu0 0.0
    %627 = vmatpush1.msra.mxu0 0.0
    %628 = vmatprep.subr.mxu0 0.0
    %629 = vmatpush1.msra.mxu0 0.0
    %630 = vmatprep.subr.mxu0 0.0
    %631 = vmatpush1.msra.mxu0 0.0
    %632 = vmatprep.subr.mxu0 0.0
    %633 = vmatpush1.msra.mxu0 0.0
    %634 = vmatprep.subr.mxu0 0.0
    %635 = vmatpush1.msra.mxu0 0.0
    %636 = vmatprep.subr.mxu0 0.0
    %637 = vmatpush1.msra.mxu0 0.0
    %638 = vmatprep.subr.mxu0 0.0
    %639 = vmatpush1.msra.mxu0 0.0
    %640 = vmatprep.subr.mxu0 0.0
    %641 = vmatpush1.msra.mxu0 0.0
    %642 = vmatprep.subr.mxu0 0.0
    %643 = vmatpush1.msra.mxu0 0.0
    %644 = vmatprep.subr.mxu0 0.0
    %645 = vmatpush1.msra.mxu0 0.0
    %646 = vmatprep.subr.mxu0 0.0
    %647 = vmatpush1.msra.mxu0 0.0
    %648 = vmatprep.subr.mxu0 0.0
    %649 = vmatpush1.msra.mxu0 0.0
    %650 = vmatprep.subr.mxu0 0.0
    %651 = vmatpush1.msra.mxu0 0.0
    %652 = vmatprep.subr.mxu0 0.0
    %653 = vmatpush1.msra.mxu0 0.0
    %654 = vmatprep.subr.mxu0 0.0
    %655 = vmatpush1.msra.mxu0 0.0
    %656 = vmatprep.mubr.f32.mxu0 0.0
    %657 = vmatmul.mubr.f32.gmra.mrb[0].mxu0 %v569
    %v658 = vpop.f32.mrb[0].mxu0
    %v659 = vadd.f32 0.0, %v658
    %v660 = vpop.f32.mrb[0].mxu0
    %661 = vmatprep.mubr.f32.mxu0 0.0
    %662 = vmatmul.mubr.f32.gmra.mrb[0].mxu0 %v572
    %v663 = vpop.f32.mrb[0].mxu0
    %v664 = vadd.f32 0.0, %v663
    %v665 = vpop.f32.mrb[0].mxu0
    %666 = vmatprep.mubr.f32.mxu0 0.0
    %667 = vmatmul.mubr.f32.gmra.mrb[0].mxu0 %v575
    %v668 = vpop.f32.mrb[0].mxu0
    %v669 = vadd.f32 0.0, %v668
    %v670 = vpop.f32.mrb[0].mxu0
    %671 = vmatprep.mubr.f32.mxu0 0.0
    %672 = vmatmul.mubr.f32.gmra.mrb[0].mxu0 %v578
    %v673 = vpop.f32.mrb[0].mxu0
    %v674 = vadd.f32 0.0, %v673
    %v675 = vpop.f32.mrb[0].mxu0
    %676 = vmatprep.mubr.f32.mxu0 0.0
    %677 = vmatmul.mubr.f32.gmra.mrb[0].mxu0 %v581
    %v678 = vpop.f32.mrb[0].mxu0
    %v679 = vadd.f32 0.0, %v678
    %v680 = vpop.f32.mrb[0].mxu0
    %681 = vmatprep.mubr.f32.mxu0 0.0
    %682 = vmatmul.mubr.f32.gmra.mrb[0].mxu0 %v584
    %v683 = vpop.f32.mrb[0].mxu0
    %v684 = vadd.f32 0.0, %v683
    %v685 = vpop.f32.mrb[0].mxu0
    %686 = vmatprep.mubr.f32.mxu0 0.0
    %687 = vmatmul.mubr.f32.gmra.mrb[0].mxu0 %v587
    %v688 = vpop.f32.mrb[0].mxu0
    %v689 = vadd.f32 0.0, %v688
    %v690 = vpop.f32.mrb[0].mxu0
    %691 = vmatprep.mubr.f32.mxu0 0.0
    %692 = vmatmul.mubr.f32.gmra.mrb[0].mxu0 %v590
    %v693 = vpop.f32.mrb[0].mxu0
    %v694 = vadd.f32 0.0, %v693
    %v695 = vpop.f32.mrb[0].mxu0
    %696 = vdwg.mxu0
    %v697 = vld [vmem:[#allocation2] sm:$0xff]
    %v698 = vld [vmem:[#allocation2 + $0x8] sm:$0xff]
    %v699 = vld [vmem:[#allocation2 + $0x10] sm:$0xff]
    %v700 = vld [vmem:[#allocation2 + $0x18] sm:$0xff]
    %v701 = vld [vmem:[#allocation2 + $0x20] sm:$0xff]
    %v702 = vld [vmem:[#allocation2 + $0x28] sm:$0xff]
    %v703 = vld [vmem:[#allocation2 + $0x30] sm:$0xff]
    %v704 = vld [vmem:[#allocation2 + $0x38] sm:$0xff]
    %s705 = scalar_lea.vmem [#allocation2], 64
    %v706 = vld [vmem:[%s705] sm:$0xff]
    %v707 = vld [vmem:[%s705 + $0x8] sm:$0xff]
    %v708 = vld [vmem:[%s705 + $0x10] sm:$0xff]
    %v709 = vld [vmem:[%s705 + $0x18] sm:$0xff]
    %v710 = vld [vmem:[%s705 + $0x20] sm:$0xff]
    %v711 = vld [vmem:[%s705 + $0x28] sm:$0xff]
    %v712 = vld [vmem:[%s705 + $0x30] sm:$0xff]
    %v713 = vld [vmem:[%s705 + $0x38] sm:$0xff]
    %722 = vrot.lane.b32.xlu0 %v659, 96
    %v723 = vpop.permute.xlu0 %722
    %724 = vrot.lane.b32.xlu0 %v664, 96
    %v725 = vpop.permute.xlu0 %724
    %726 = vrot.lane.b32.xlu0 %v669, 96
    %v727 = vpop.permute.xlu0 %726
    %728 = vrot.lane.b32.xlu0 %v674, 96
    %v729 = vpop.permute.xlu0 %728
    %730 = vrot.lane.b32.xlu0 %v679, 96
    %v731 = vpop.permute.xlu0 %730
    %732 = vrot.lane.b32.xlu0 %v684, 96
    %v733 = vpop.permute.xlu0 %732
    %734 = vrot.lane.b32.xlu0 %v689, 96
    %v735 = vpop.permute.xlu0 %734
    %736 = vrot.lane.b32.xlu0 %v694, 96
    %v737 = vpop.permute.xlu0 %736
    %v747 = vsel %vm370, %v706, 0
    %v750 = vsel %vm370, %v707, 0
    %v753 = vsel %vm370, %v708, 0
    %v756 = vsel %vm370, %v709, 0
    %v759 = vsel %vm370, %v710, 0
    %v762 = vsel %vm370, %v711, 0
    %v765 = vsel %vm370, %v712, 0
    %v768 = vsel %vm370, %v713, 0
    %770 = vmatprep.subr.mxu0 0.0
    %771 = vmatpush1.msra.mxu0 %v723
    %772 = vmatprep.subr.mxu0 0.0
    %773 = vmatpush1.msra.mxu0 %v725
    %774 = vmatprep.subr.mxu0 0.0
    %775 = vmatpush1.msra.mxu0 %v727
    %776 = vmatprep.subr.mxu0 0.0
    %777 = vmatpush1.msra.mxu0 %v729
    %778 = vmatprep.subr.mxu0 0.0
    %779 = vmatpush1.msra.mxu0 %v731
    %780 = vmatprep.subr.mxu0 0.0
    %781 = vmatpush1.msra.mxu0 %v733
    %782 = vmatprep.subr.mxu0 0.0
    %783 = vmatpush1.msra.mxu0 %v735
    %784 = vmatprep.subr.mxu0 0.0
    %785 = vmatpush1.msra.mxu0 %v737
    %786 = vmatprep.subr.mxu0 0.0
    %787 = vmatpush1.msra.mxu0 0.0
    %788 = vmatprep.subr.mxu0 0.0
    %789 = vmatpush1.msra.mxu0 0.0
    %790 = vmatprep.subr.mxu0 0.0
    %791 = vmatpush1.msra.mxu0 0.0
    %792 = vmatprep.subr.mxu0 0.0
    %793 = vmatpush1.msra.mxu0 0.0
    %794 = vmatprep.subr.mxu0 0.0
    %795 = vmatpush1.msra.mxu0 0.0
    %796 = vmatprep.subr.mxu0 0.0
    %797 = vmatpush1.msra.mxu0 0.0
    %798 = vmatprep.subr.mxu0 0.0
    %799 = vmatpush1.msra.mxu0 0.0
    %800 = vmatprep.subr.mxu0 0.0
    %801 = vmatpush1.msra.mxu0 0.0
    %802 = vmatprep.subr.mxu0 0.0
    %803 = vmatpush1.msra.mxu0 0.0
    %804 = vmatprep.subr.mxu0 0.0
    %805 = vmatpush1.msra.mxu0 0.0
    %806 = vmatprep.subr.mxu0 0.0
    %807 = vmatpush1.msra.mxu0 0.0
    %808 = vmatprep.subr.mxu0 0.0
    %809 = vmatpush1.msra.mxu0 0.0
    %810 = vmatprep.subr.mxu0 0.0
    %811 = vmatpush1.msra.mxu0 0.0
    %812 = vmatprep.subr.mxu0 0.0
    %813 = vmatpush1.msra.mxu0 0.0
    %814 = vmatprep.subr.mxu0 0.0
    %815 = vmatpush1.msra.mxu0 0.0
    %816 = vmatprep.subr.mxu0 0.0
    %817 = vmatpush1.msra.mxu0 0.0
    %818 = vmatprep.subr.mxu0 0.0
    %819 = vmatpush1.msra.mxu0 0.0
    %820 = vmatprep.subr.mxu0 0.0
    %821 = vmatpush1.msra.mxu0 0.0
    %822 = vmatprep.subr.mxu0 0.0
    %823 = vmatpush1.msra.mxu0 0.0
    %824 = vmatprep.subr.mxu0 0.0
    %825 = vmatpush1.msra.mxu0 0.0
    %826 = vmatprep.subr.mxu0 0.0
    %827 = vmatpush1.msra.mxu0 0.0
    %828 = vmatprep.subr.mxu0 0.0
    %829 = vmatpush1.msra.mxu0 0.0
    %830 = vmatprep.subr.mxu0 0.0
    %831 = vmatpush1.msra.mxu0 0.0
    %832 = vmatprep.subr.mxu0 0.0
    %833 = vmatpush1.msra.mxu0 0.0
    %834 = vmatprep.mubr.f32.mxu0 0.0
    %835 = vmatmul.mubr.f32.gmra.mrb[0].mxu0 %v747
    %v836 = vpop.f32.mrb[0].mxu0
    %v837 = vadd.f32 0.0, %v836
    %v838 = vpop.f32.mrb[0].mxu0
    %839 = vmatprep.mubr.f32.mxu0 0.0
    %840 = vmatmul.mubr.f32.gmra.mrb[0].mxu0 %v750
    %v841 = vpop.f32.mrb[0].mxu0
    %v842 = vadd.f32 0.0, %v841
    %v843 = vpop.f32.mrb[0].mxu0
    %844 = vmatprep.mubr.f32.mxu0 0.0
    %845 = vmatmul.mubr.f32.gmra.mrb[0].mxu0 %v753
    %v846 = vpop.f32.mrb[0].mxu0
    %v847 = vadd.f32 0.0, %v846
    %v848 = vpop.f32.mrb[0].mxu0
    %849 = vmatprep.mubr.f32.mxu0 0.0
    %850 = vmatmul.mubr.f32.gmra.mrb[0].mxu0 %v756
    %v851 = vpop.f32.mrb[0].mxu0
    %v852 = vadd.f32 0.0, %v851
    %v853 = vpop.f32.mrb[0].mxu0
    %854 = vmatprep.mubr.f32.mxu0 0.0
    %855 = vmatmul.mubr.f32.gmra.mrb[0].mxu0 %v759
    %v856 = vpop.f32.mrb[0].mxu0
    %v857 = vadd.f32 0.0, %v856
    %v858 = vpop.f32.mrb[0].mxu0
    %859 = vmatprep.mubr.f32.mxu0 0.0
    %860 = vmatmul.mubr.f32.gmra.mrb[0].mxu0 %v762
    %v861 = vpop.f32.mrb[0].mxu0
    %v862 = vadd.f32 0.0, %v861
    %v863 = vpop.f32.mrb[0].mxu0
    %864 = vmatprep.mubr.f32.mxu0 0.0
    %865 = vmatmul.mubr.f32.gmra.mrb[0].mxu0 %v765
    %v866 = vpop.f32.mrb[0].mxu0
    %v867 = vadd.f32 0.0, %v866
    %v868 = vpop.f32.mrb[0].mxu0
    %869 = vmatprep.mubr.f32.mxu0 0.0
    %870 = vmatmul.mubr.f32.gmra.mrb[0].mxu0 %v768
    %v871 = vpop.f32.mrb[0].mxu0
    %v872 = vadd.f32 0.0, %v871
    %v873 = vpop.f32.mrb[0].mxu0
    %874 = vdwg.mxu0
    %v876 = vsel %vm370, %v697, 0
    %v879 = vsel %vm370, %v698, 0
    %v882 = vsel %vm370, %v699, 0
    %v885 = vsel %vm370, %v700, 0
    %v888 = vsel %vm370, %v701, 0
    %v891 = vsel %vm370, %v702, 0
    %v894 = vsel %vm370, %v703, 0
    %v897 = vsel %vm370, %v704, 0
    %899 = vmatprep.subr.mxu0 0.0
    %900 = vmatpush1.msra.mxu0 %v659
    %901 = vmatprep.subr.mxu0 0.0
    %902 = vmatpush1.msra.mxu0 %v664
    %903 = vmatprep.subr.mxu0 0.0
    %904 = vmatpush1.msra.mxu0 %v669
    %905 = vmatprep.subr.mxu0 0.0
    %906 = vmatpush1.msra.mxu0 %v674
    %907 = vmatprep.subr.mxu0 0.0
    %908 = vmatpush1.msra.mxu0 %v679
    %909 = vmatprep.subr.mxu0 0.0
    %910 = vmatpush1.msra.mxu0 %v684
    %911 = vmatprep.subr.mxu0 0.0
    %912 = vmatpush1.msra.mxu0 %v689
    %913 = vmatprep.subr.mxu0 0.0
    %914 = vmatpush1.msra.mxu0 %v694
    %915 = vmatprep.subr.mxu0 0.0
    %916 = vmatpush1.msra.mxu0 0.0
    %917 = vmatprep.subr.mxu0 0.0
    %918 = vmatpush1.msra.mxu0 0.0
    %919 = vmatprep.subr.mxu0 0.0
    %920 = vmatpush1.msra.mxu0 0.0
    %921 = vmatprep.subr.mxu0 0.0
    %922 = vmatpush1.msra.mxu0 0.0
    %923 = vmatprep.subr.mxu0 0.0
    %924 = vmatpush1.msra.mxu0 0.0
    %925 = vmatprep.subr.mxu0 0.0
    %926 = vmatpush1.msra.mxu0 0.0
    %927 = vmatprep.subr.mxu0 0.0
    %928 = vmatpush1.msra.mxu0 0.0
    %929 = vmatprep.subr.mxu0 0.0
    %930 = vmatpush1.msra.mxu0 0.0
    %931 = vmatprep.subr.mxu0 0.0
    %932 = vmatpush1.msra.mxu0 0.0
    %933 = vmatprep.subr.mxu0 0.0
    %934 = vmatpush1.msra.mxu0 0.0
    %935 = vmatprep.subr.mxu0 0.0
    %936 = vmatpush1.msra.mxu0 0.0
    %937 = vmatprep.subr.mxu0 0.0
    %938 = vmatpush1.msra.mxu0 0.0
    %939 = vmatprep.subr.mxu0 0.0
    %940 = vmatpush1.msra.mxu0 0.0
    %941 = vmatprep.subr.mxu0 0.0
    %942 = vmatpush1.msra.mxu0 0.0
    %943 = vmatprep.subr.mxu0 0.0
    %944 = vmatpush1.msra.mxu0 0.0
    %945 = vmatprep.subr.mxu0 0.0
    %946 = vmatpush1.msra.mxu0 0.0
    %947 = vmatprep.subr.mxu0 0.0
    %948 = vmatpush1.msra.mxu0 0.0
    %949 = vmatprep.subr.mxu0 0.0
    %950 = vmatpush1.msra.mxu0 0.0
    %951 = vmatprep.subr.mxu0 0.0
    %952 = vmatpush1.msra.mxu0 0.0
    %953 = vmatprep.subr.mxu0 0.0
    %954 = vmatpush1.msra.mxu0 0.0
    %955 = vmatprep.subr.mxu0 0.0
    %956 = vmatpush1.msra.mxu0 0.0
    %957 = vmatprep.subr.mxu0 0.0
    %958 = vmatpush1.msra.mxu0 0.0
    %959 = vmatprep.subr.mxu0 0.0
    %960 = vmatpush1.msra.mxu0 0.0
    %961 = vmatprep.subr.mxu0 0.0
    %962 = vmatpush1.msra.mxu0 0.0
    %963 = vmatprep.mubr.f32.mxu0 0.0
    %964 = vmatmul.mubr.f32.gmra.mrb[0].mxu0 %v876
    %v965 = vpop.f32.mrb[0].mxu0
    %v966 = vadd.f32 %v837, %v965
    %v967 = vpop.f32.mrb[0].mxu0
    %968 = vmatprep.mubr.f32.mxu0 0.0
    %969 = vmatmul.mubr.f32.gmra.mrb[0].mxu0 %v879
    %v970 = vpop.f32.mrb[0].mxu0
    %v971 = vadd.f32 %v842, %v970
    %v972 = vpop.f32.mrb[0].mxu0
    %973 = vmatprep.mubr.f32.mxu0 0.0
    %974 = vmatmul.mubr.f32.gmra.mrb[0].mxu0 %v882
    %v975 = vpop.f32.mrb[0].mxu0
    %v976 = vadd.f32 %v847, %v975
    %v977 = vpop.f32.mrb[0].mxu0
    %978 = vmatprep.mubr.f32.mxu0 0.0
    %979 = vmatmul.mubr.f32.gmra.mrb[0].mxu0 %v885
    %v980 = vpop.f32.mrb[0].mxu0
    %v981 = vadd.f32 %v852, %v980
    %v982 = vpop.f32.mrb[0].mxu0
    %983 = vmatprep.mubr.f32.mxu0 0.0
    %984 = vmatmul.mubr.f32.gmra.mrb[0].mxu0 %v888
    %v985 = vpop.f32.mrb[0].mxu0
    %v986 = vadd.f32 %v857, %v985
    %v987 = vpop.f32.mrb[0].mxu0
    %988 = vmatprep.mubr.f32.mxu0 0.0
    %989 = vmatmul.mubr.f32.gmra.mrb[0].mxu0 %v891
    %v990 = vpop.f32.mrb[0].mxu0
    %v991 = vadd.f32 %v862, %v990
    %v992 = vpop.f32.mrb[0].mxu0
    %993 = vmatprep.mubr.f32.mxu0 0.0
    %994 = vmatmul.mubr.f32.gmra.mrb[0].mxu0 %v894
    %v995 = vpop.f32.mrb[0].mxu0
    %v996 = vadd.f32 %v867, %v995
    %v997 = vpop.f32.mrb[0].mxu0
    %998 = vmatprep.mubr.f32.mxu0 0.0
    %999 = vmatmul.mubr.f32.gmra.mrb[0].mxu0 %v897
    %v1000 = vpop.f32.mrb[0].mxu0
    %v1001 = vadd.f32 %v872, %v1000
    %v1002 = vpop.f32.mrb[0].mxu0
    %1003 = vdwg.mxu0
    %v1004 = vld [vmem:[%s8] sm:$0x1]
    %v1006 = vlaneseq
    %v1007 = vshrl.u32 %v1006, 7
    %v1008 = vsub.s32 0, %v1007
    %v1009 = vrot.slane %v1004, %v1008
    %v1011 = vadd.f32 %v966, %v1009
    %v1012 = vadd.f32 %v971, %v1009
    %v1013 = vadd.f32 %v976, %v1009
    %v1014 = vadd.f32 %v981, %v1009
    %v1015 = vadd.f32 %v986, %v1009
    %v1016 = vadd.f32 %v991, %v1009
    %v1017 = vadd.f32 %v996, %v1009
    %v1018 = vadd.f32 %v1001, %v1009
    %v1019 = vmax.f32 %v1011, 0.0
    %v1020 = vmax.f32 %v1012, 0.0
    %v1021 = vmax.f32 %v1013, 0.0
    %v1022 = vmax.f32 %v1014, 0.0
    %v1023 = vmax.f32 %v1015, 0.0
    %v1024 = vmax.f32 %v1016, 0.0
    %v1025 = vmax.f32 %v1017, 0.0
    %v1026 = vmax.f32 %v1018, 0.0
    %v1027 = vmul.f32 %v1019, %v1019
    %v1028 = vmul.f32 %v1020, %v1020
    %v1029 = vmul.f32 %v1021, %v1021
    %v1030 = vmul.f32 %v1022, %v1022
    %v1031 = vmul.f32 %v1023, %v1023
    %v1032 = vmul.f32 %v1024, %v1024
    %v1033 = vmul.f32 %v1025, %v1025
    %v1034 = vmul.f32 %v1026, %v1026
    %v1035 = vsel %vm225, %v1027, 0.0
    %1036 = vadd.xlane.f32.xlu0 %v1035
    %v1037 = vpop.xlane.xlu0 %1036
    %v1038 = vsel %vm225, %v1028, 0.0
    %1039 = vadd.xlane.f32.xlu0 %v1038
    %v1040 = vpop.xlane.xlu0 %1039
    %v1041 = vsel %vm225, %v1029, 0.0
    %1042 = vadd.xlane.f32.xlu0 %v1041
    %v1043 = vpop.xlane.xlu0 %1042
    %v1044 = vsel %vm225, %v1030, 0.0
    %1045 = vadd.xlane.f32.xlu0 %v1044
    %v1046 = vpop.xlane.xlu0 %1045
    %v1047 = vsel %vm225, %v1031, 0.0
    %1048 = vadd.xlane.f32.xlu0 %v1047
    %v1049 = vpop.xlane.xlu0 %1048
    %v1050 = vsel %vm225, %v1032, 0.0
    %1051 = vadd.xlane.f32.xlu0 %v1050
    %v1052 = vpop.xlane.xlu0 %1051
    %v1053 = vsel %vm225, %v1033, 0.0
    %1054 = vadd.xlane.f32.xlu0 %v1053
    %v1055 = vpop.xlane.xlu0 %1054
    %v1056 = vsel %vm225, %v1034, 0.0
    %1057 = vadd.xlane.f32.xlu0 %v1056
    %v1058 = vpop.xlane.xlu0 %1057
    %v1059 = vmax.f32 %v1037, 1e-24
    %v1060 = vmax.f32 %v1040, 1e-24
    %v1061 = vmax.f32 %v1043, 1e-24
    %v1062 = vmax.f32 %v1046, 1e-24
    %v1063 = vmax.f32 %v1049, 1e-24
    %v1064 = vmax.f32 %v1052, 1e-24
    %v1065 = vmax.f32 %v1055, 1e-24
    %v1066 = vmax.f32 %v1058, 1e-24
    %v1067 = vrsqrt.pop %v1059
    %v1068 = vrsqrt.pop %v1060
    %v1069 = vrsqrt.pop %v1061
    %v1070 = vrsqrt.pop %v1062
    %v1071 = vrsqrt.pop %v1063
    %v1072 = vrsqrt.pop %v1064
    %v1073 = vrsqrt.pop %v1065
    %v1074 = vrsqrt.pop %v1066
    %v1075 = vmul.f32 %v1019, %v1067
    %v1076 = vmul.f32 %v1020, %v1068
    %v1077 = vmul.f32 %v1021, %v1069
    %v1078 = vmul.f32 %v1022, %v1070
    %v1079 = vmul.f32 %v1023, %v1071
    %v1080 = vmul.f32 %v1024, %v1072
    %v1081 = vmul.f32 %v1025, %v1073
    %v1082 = vmul.f32 %v1026, %v1074
    %v1083 = vld [vmem:[%s9] sm:$0xff]
    %v1084 = vld [vmem:[%s9 + $0x8] sm:$0xff]
    %v1085 = vld [vmem:[%s9 + $0x10] sm:$0xff]
    %v1086 = vld [vmem:[%s9 + $0x18] sm:$0xff]
    %v1087 = vld [vmem:[%s10] sm:$0x1]
    %v1089 = vlaneseq
    %v1090 = vshrl.u32 %v1089, 7
    %v1091 = vsub.s32 0, %v1090
    %v1092 = vrot.slane %v1087, %v1091
    %v1095 = vsel %vm225, %v1075, 0
    %v1098 = vsel %vm225, %v1076, 0
    %v1101 = vsel %vm225, %v1077, 0
    %v1104 = vsel %vm225, %v1078, 0
    %v1107 = vsel %vm225, %v1079, 0
    %v1110 = vsel %vm225, %v1080, 0
    %v1113 = vsel %vm225, %v1081, 0
    %v1116 = vsel %vm225, %v1082, 0
    %1118 = vmatprep.subr.mxu0 0.0
    %1119 = vmatpush1.msra.mxu0 %v1083
    %1120 = vmatprep.subr.mxu0 0.0
    %1121 = vmatpush1.msra.mxu0 %v1084
    %1122 = vmatprep.subr.mxu0 0.0
    %1123 = vmatpush1.msra.mxu0 %v1085
    %1124 = vmatprep.subr.mxu0 0.0
    %1125 = vmatpush1.msra.mxu0 %v1086
    %1126 = vmatprep.subr.mxu0 0.0
    %1127 = vmatpush1.msra.mxu0 0.0
    %1128 = vmatprep.subr.mxu0 0.0
    %1129 = vmatpush1.msra.mxu0 0.0
    %1130 = vmatprep.subr.mxu0 0.0
    %1131 = vmatpush1.msra.mxu0 0.0
    %1132 = vmatprep.subr.mxu0 0.0
    %1133 = vmatpush1.msra.mxu0 0.0
    %1134 = vmatprep.subr.mxu0 0.0
    %1135 = vmatpush1.msra.mxu0 0.0
    %1136 = vmatprep.subr.mxu0 0.0
    %1137 = vmatpush1.msra.mxu0 0.0
    %1138 = vmatprep.subr.mxu0 0.0
    %1139 = vmatpush1.msra.mxu0 0.0
    %1140 = vmatprep.subr.mxu0 0.0
    %1141 = vmatpush1.msra.mxu0 0.0
    %1142 = vmatprep.subr.mxu0 0.0
    %1143 = vmatpush1.msra.mxu0 0.0
    %1144 = vmatprep.subr.mxu0 0.0
    %1145 = vmatpush1.msra.mxu0 0.0
    %1146 = vmatprep.subr.mxu0 0.0
    %1147 = vmatpush1.msra.mxu0 0.0
    %1148 = vmatprep.subr.mxu0 0.0
    %1149 = vmatpush1.msra.mxu0 0.0
    %1150 = vmatprep.subr.mxu0 0.0
    %1151 = vmatpush1.msra.mxu0 0.0
    %1152 = vmatprep.subr.mxu0 0.0
    %1153 = vmatpush1.msra.mxu0 0.0
    %1154 = vmatprep.subr.mxu0 0.0
    %1155 = vmatpush1.msra.mxu0 0.0
    %1156 = vmatprep.subr.mxu0 0.0
    %1157 = vmatpush1.msra.mxu0 0.0
    %1158 = vmatprep.subr.mxu0 0.0
    %1159 = vmatpush1.msra.mxu0 0.0
    %1160 = vmatprep.subr.mxu0 0.0
    %1161 = vmatpush1.msra.mxu0 0.0
    %1162 = vmatprep.subr.mxu0 0.0
    %1163 = vmatpush1.msra.mxu0 0.0
    %1164 = vmatprep.subr.mxu0 0.0
    %1165 = vmatpush1.msra.mxu0 0.0
    %1166 = vmatprep.subr.mxu0 0.0
    %1167 = vmatpush1.msra.mxu0 0.0
    %1168 = vmatprep.subr.mxu0 0.0
    %1169 = vmatpush1.msra.mxu0 0.0
    %1170 = vmatprep.subr.mxu0 0.0
    %1171 = vmatpush1.msra.mxu0 0.0
    %1172 = vmatprep.subr.mxu0 0.0
    %1173 = vmatpush1.msra.mxu0 0.0
    %1174 = vmatprep.subr.mxu0 0.0
    %1175 = vmatpush1.msra.mxu0 0.0
    %1176 = vmatprep.subr.mxu0 0.0
    %1177 = vmatpush1.msra.mxu0 0.0
    %1178 = vmatprep.subr.mxu0 0.0
    %1179 = vmatpush1.msra.mxu0 0.0
    %1180 = vmatprep.subr.mxu0 0.0
    %1181 = vmatpush1.msra.mxu0 0.0
    %1182 = vmatprep.mubr.f32.mxu0 0.0
    %1183 = vmatmul.mubr.f32.gmra.mrb[0].mxu0 %v1095
    %v1184 = vpop.f32.mrb[0].mxu0
    %v1185 = vadd.f32 %v1092, %v1184
    %v1186 = vpop.f32.mrb[0].mxu0
    %1187 = vmatprep.mubr.f32.mxu0 0.0
    %1188 = vmatmul.mubr.f32.gmra.mrb[0].mxu0 %v1098
    %v1189 = vpop.f32.mrb[0].mxu0
    %v1190 = vadd.f32 %v1092, %v1189
    %v1191 = vpop.f32.mrb[0].mxu0
    %1192 = vmatprep.mubr.f32.mxu0 0.0
    %1193 = vmatmul.mubr.f32.gmra.mrb[0].mxu0 %v1101
    %v1194 = vpop.f32.mrb[0].mxu0
    %v1195 = vadd.f32 %v1092, %v1194
    %v1196 = vpop.f32.mrb[0].mxu0
    %1197 = vmatprep.mubr.f32.mxu0 0.0
    %1198 = vmatmul.mubr.f32.gmra.mrb[0].mxu0 %v1104
    %v1199 = vpop.f32.mrb[0].mxu0
    %v1200 = vadd.f32 %v1092, %v1199
    %v1201 = vpop.f32.mrb[0].mxu0
    %1202 = vmatprep.mubr.f32.mxu0 0.0
    %1203 = vmatmul.mubr.f32.gmra.mrb[0].mxu0 %v1107
    %v1204 = vpop.f32.mrb[0].mxu0
    %v1205 = vadd.f32 %v1092, %v1204
    %v1206 = vpop.f32.mrb[0].mxu0
    %1207 = vmatprep.mubr.f32.mxu0 0.0
    %1208 = vmatmul.mubr.f32.gmra.mrb[0].mxu0 %v1110
    %v1209 = vpop.f32.mrb[0].mxu0
    %v1210 = vadd.f32 %v1092, %v1209
    %v1211 = vpop.f32.mrb[0].mxu0
    %1212 = vmatprep.mubr.f32.mxu0 0.0
    %1213 = vmatmul.mubr.f32.gmra.mrb[0].mxu0 %v1113
    %v1214 = vpop.f32.mrb[0].mxu0
    %v1215 = vadd.f32 %v1092, %v1214
    %v1216 = vpop.f32.mrb[0].mxu0
    %1217 = vmatprep.mubr.f32.mxu0 0.0
    %1218 = vmatmul.mubr.f32.gmra.mrb[0].mxu0 %v1116
    %v1219 = vpop.f32.mrb[0].mxu0
    %v1220 = vadd.f32 %v1092, %v1219
    %v1221 = vpop.f32.mrb[0].mxu0
    %1222 = vdwg.mxu0
    %vm1223 = vcmask 64512
    %1224 = vst.msk [vmem:[%s11] sm:$0xff] %vm1223, %v1185
    %1225 = vst.msk [vmem:[%s11 + $0x8] sm:$0xff] %vm1223, %v1190
    %1226 = vst.msk [vmem:[%s11 + $0x10] sm:$0xff] %vm1223, %v1195
    %1227 = vst.msk [vmem:[%s11 + $0x18] sm:$0xff] %vm1223, %v1200
    %1228 = vst.msk [vmem:[%s11 + $0x20] sm:$0xff] %vm1223, %v1205
    %1229 = vst.msk [vmem:[%s11 + $0x28] sm:$0xff] %vm1223, %v1210
    %1230 = vst.msk [vmem:[%s11 + $0x30] sm:$0xff] %vm1223, %v1215
    %1231 = vst.msk [vmem:[%s11 + $0x38] sm:$0xff] %vm1223, %v1220
    // Predicated region
    $region54: #{tpu_custom_call.1} parent=1 // pred_check
      _
    $region55: #{tpu_custom_call.1} parent=1 // pred_check_branch
      %1233 = sbr.rel (0) target = $region57
    $region56: #{tpu_custom_call.1} parent=1 // pred_region
      _
    $region57: #{tpu_custom_call.1} parent=1 // pred_fallthru
      _
    // Predicated region
    $region58: #{tpu_custom_call.1} parent=1 // pred_check
      _
    $region59: #{tpu_custom_call.1} parent=1 // pred_check_branch
      %1235 = sbr.rel (0) target = $region61
    $region60: #{tpu_custom_call.1} parent=1 // pred_region
      _
    $region61: #{tpu_custom_call.1} parent=1 // pred_fallthru
      _
    %1236 = vsyncpa [#allocation3], 1
    %1237 = vsyncpa [#allocation5], 1

</llo_original>
